<compile_context>
chip_gen: v7x
topology: tpu7x:2x2x1
jax: 0.10.0
libtpu: 0.0.40
codegen_flags: <defaults>
</compile_context>

<pallas_src>
import functools
import math

import jax
import jax.numpy as jnp
import numpy as np
from jax.experimental import pallas as pl
from jax.experimental.pallas import tpu as pltpu

LANE = 128
RGB_TARGET_ELEMS = 512 * 512      # elems per rgb grid step  -> ~8 MiB f32 out block
COLOR_TARGET_ELEMS = 512 * 128    # elems per channel / step -> ~6 MiB f32 out block
VMEM_LIMIT_BYTES = 32 * 1024 * 1024


def _round_up(x, m):
    return ((x + m - 1) // m) * m


def _pick_slab_width(n):
    """Largest lane-slab width (512/256/128) that divides n exactly; if none
    divides, fall back to 128 with (minimal) padding."""
    for w in (512, 256, 128):
        if n % w == 0:
            return w, False
    return 128, True


def _sublane_align(dtype):
    """Row alignment for a block whose input dtype packs along sublanes."""
    return {1: 32, 2: 16}.get(np.dtype(dtype).itemsize, 8)


def _choose_tile_r(rows, max_tile_r, min_steps, align):
    """Row tile: multiple of `align` (or the full extent), <= rows, capped at
    max_tile_r, and yielding >= min_steps grid steps whenever rows allows it
    (so both v7x TensorCores get work)."""
    max_tile_r = max(align, _round_up(max_tile_r, align))
    if rows >= align * min_steps:
        tile_r = min(max_tile_r, _round_up(pl.cdiv(rows, min_steps), align))
        if tile_r >= rows:
            tile_r = rows                 # single full-extent block
        return tile_r
    return rows                           # tiny: one full-extent block


# ---------------------------------------------------------------------------
# Kernels
# ---------------------------------------------------------------------------
def _rgb_bitplane_kernel(x_ref, o_ref, *, nbits):
    # x_ref: (TR, TW) integer pixel values (any int dtype, upcast in-kernel)
    # o_ref: (nbits, TR, TW) float32
    # torch: res_k = remainder(x, 2); x = floor_div(x, 2)  ==  iterative >>/&1
    # (matches torch for the non-negative integer pixel values used here)
    x = x_ref[...].astype(jnp.int32)
    for k in range(nbits):
        o_ref[k] = (x & 1).astype(jnp.float32)
        if k + 1 < nbits:
            x = x >> 1


def _color_bitplane_kernel(x_ref, o_ref, *, mode, nbits):
    # x_ref: (1, 3, TR, TW) raw pixel values in [0, 255] (any dtype)
    # o_ref: (nbits, 1, 3, TR, TW) float32
    # Op ordering kept identical to torch (no constant folding) for bit parity.
    r = x_ref[0, 0].astype(jnp.float32) / 255.0   # torch.div(x, 255.0)
    g = x_ref[0, 1].astype(jnp.float32) / 255.0
    b = x_ref[0, 2].astype(jnp.float32) / 255.0

    if mode == "ycbcr":
        y = 0.299 * r + 0.587 * g + 0.114 * b
        c0 = y * 235.0
        c1 = ((b - y) * 0.564 + 0.5) * 240.0
        c2 = ((r - y) * 0.713 + 0.5) * 240.0
    elif mode == "xyz":
        c0 = (0.412453 * r + 0.35758 * g + 0.180423 * b) * 95.047
        c1 = (0.212671 * r + 0.71516 * g + 0.072169 * b) * 100.0
        c2 = (0.019334 * r + 0.119193 * g + 0.950227 * b) * 108.883
    elif mode == "cmy":
        c0 = (1.0 - r) * 100.0
        c1 = (1.0 - g) * 100.0
        c2 = (1.0 - b) * 100.0
    else:
        raise ValueError(mode)

    # torch .byte(): cast-to-uint8 (trunc toward zero; values are in [0,255]).
    chans = (c0.astype(jnp.int32), c1.astype(jnp.int32), c2.astype(jnp.int32))
    for k in range(nbits):
        for c in range(3):
            o_ref[k, 0, c] = (chans[c] & 1).astype(jnp.float32)
        if k + 1 < nbits:
            chans = tuple(ch >> 1 for ch in chans)


# ---------------------------------------------------------------------------
# Wrappers (glue: layout / pallas_call setup)
# ---------------------------------------------------------------------------
def _encode_rgb(x):
    nbits = math.ceil(math.log2(255))                         # 8
    orig_shape = tuple(x.shape)
    flat = x.reshape(-1)                                      # keep input dtype
    total = flat.shape[0]

    width, needs_pad = _pick_slab_width(total)
    padded_total = _round_up(total, width) if needs_pad else total
    if needs_pad:  # rare fallback; pads at most width-1 elements
        flat = jnp.pad(flat, (0, padded_total - total))
    rows = padded_total // width
    xi = flat.reshape(rows, width)                            # free view

    align = _sublane_align(flat.dtype)
    tile_r = _choose_tile_r(rows, RGB_TARGET_ELEMS // width, min_steps=2,
                            align=align)
    grid = (pl.cdiv(rows, tile_r),)                           # boundary block masked

    out = pl.pallas_call(
        functools.partial(_rgb_bitplane_kernel, nbits=nbits),
        out_shape=jax.ShapeDtypeStruct((nbits, rows, width), jnp.float32),
        grid=grid,
        in_specs=[pl.BlockSpec((tile_r, width), lambda i: (i, 0))],
        out_specs=pl.BlockSpec((nbits, tile_r, width), lambda i: (0, i, 0)),
        compiler_params=pltpu.CompilerParams(
            dimension_semantics=("parallel",),
            vmem_limit_bytes=VMEM_LIMIT_BYTES),
    )(xi)
    if needs_pad:
        out = out.reshape(nbits, padded_total)[:, :total]
    return out.reshape((nbits,) + orig_shape)                 # free when no pad


def _encode_color(x, mode):
    maxv = {"ycbcr": 240, "xyz": 109, "cmy": 100}[mode]
    nbits = math.ceil(math.log2(maxv))
    if x.ndim != 4 or x.shape[1] != 3:
        raise ValueError(
            f"Input size must have a shape of (N, 3, H, W). Got {x.shape}")
    N, _, H, W = x.shape
    HW = H * W

    width, needs_pad = _pick_slab_width(HW)
    padded_hw = _round_up(HW, width) if needs_pad else HW
    xr = x.reshape(N, 3, HW)
    if needs_pad:  # rare fallback; padded garbage planes are sliced off below
        xr = jnp.pad(xr, ((0, 0), (0, 0), (0, padded_hw - HW)))
    rows = padded_hw // width
    xr = xr.reshape(N, 3, rows, width)                        # channel leading

    align = _sublane_align(x.dtype)
    min_row_steps = 1 if N >= 2 else 2                        # >=2 parallel steps total
    tile_r = _choose_tile_r(rows, COLOR_TARGET_ELEMS // width, min_row_steps,
                            align)
    grid = (N, pl.cdiv(rows, tile_r))

    out = pl.pallas_call(
        functools.partial(_color_bitplane_kernel, mode=mode, nbits=nbits),
        out_shape=jax.ShapeDtypeStruct((nbits, N, 3, rows, width), jnp.float32),
        grid=grid,
        in_specs=[pl.BlockSpec((1, 3, tile_r, width),
                               lambda n, t: (n, 0, t, 0))],
        out_specs=pl.BlockSpec((nbits, 1, 3, tile_r, width),
                               lambda n, t: (0, n, 0, t, 0)),
        compiler_params=pltpu.CompilerParams(
            dimension_semantics=("parallel", "parallel"),
            vmem_limit_bytes=VMEM_LIMIT_BYTES),
    )(xr)
    if needs_pad:
        out = out.reshape(nbits, N, 3, padded_hw)[..., :HW]
    return out.reshape(nbits, N, 3, H, W)                     # free when no pad


def bitplane_color_encode(x, color_model: str = "rgb"):
    """Equivalent of BitplaneColorEncoder(color_model).forward(x)."""
    if color_model == "rgb":
        return _encode_rgb(x)
    elif color_model in ("ycbcr", "xyz", "cmy"):
        return _encode_color(x, color_model)
    else:
        # TODO(synk): 'hsl', 'hsv', 'lab' not implemented (masked-index hue /
        # piecewise gamma paths).
        raise NotImplementedError(f"color_model={color_model!r} not implemented")


# ---------------------------------------------------------------------------
if __name__ == "__main__":
    key = jax.random.PRNGKey(0)
    # NCHW uint8-range image, small shapes: batch=2, channels=3, spatial=16
    x = jax.random.randint(key, (2, 3, 16, 16), 0, 256, dtype=jnp.int32)

    # Default color model ('rgb'), as in the nn.Module constructor.
    out_rgb = jax.block_until_ready(bitplane_color_encode(x, "rgb"))
    assert out_rgb.shape == (8, 2, 3, 16, 16) and out_rgb.dtype == jnp.float32
    ref = jnp.stack([((x >> k) & 1).astype(jnp.float32) for k in range(8)], axis=0)
    np.testing.assert_allclose(np.asarray(out_rgb), np.asarray(ref))

    # Multi-step rgb path with a ragged (non-divisible) row boundary, no padding.
    x_big = jax.random.randint(jax.random.PRNGKey(1), (1, 3, 100, 512),
                               0, 256, dtype=jnp.int32)
    out_big = jax.block_until_ready(bitplane_color_encode(x_big, "rgb"))
    ref_big = jnp.stack([((x_big >> k) & 1).astype(jnp.float32)
                         for k in range(8)], axis=0)
    np.testing.assert_allclose(np.asarray(out_big), np.asarray(ref_big))

    # uint8 input accepted directly (upcast happens in-kernel, 4x less input DMA).
    x_u8 = jax.random.randint(jax.random.PRNGKey(2), (1, 3, 128, 512),
                              0, 256, dtype=jnp.int32).astype(jnp.uint8)
    out_u8 = jax.block_until_ready(bitplane_color_encode(x_u8, "rgb"))
    ref_u8 = jnp.stack([((x_u8.astype(jnp.int32) >> k) & 1).astype(jnp.float32)
                        for k in range(8)], axis=0)
    np.testing.assert_allclose(np.asarray(out_u8), np.asarray(ref_u8))

    # Fused color-transform + bitplane path (ycbcr): reconstruct byte values
    # from the planes; tolerate +-1 for f32 rounding at truncation boundaries.
    out_ycbcr = jax.block_until_ready(bitplane_color_encode(x, "ycbcr"))
    assert out_ycbcr.shape == (8, 2, 3, 16, 16) and out_ycbcr.dtype == jnp.float32
    xf = x.astype(jnp.float32) / 255.0
    r, g, b = xf[:, 0], xf[:, 1], xf[:, 2]
    yy = 0.299 * r + 0.587 * g + 0.114 * b
    ref_int = jnp.stack([yy * 235.0,
                         ((b - yy) * 0.564 + 0.5) * 240.0,
                         ((r - yy) * 0.713 + 0.5) * 240.0],
                        axis=1).astype(jnp.int32)
    recon = sum(out_ycbcr[k] * float(1 << k) for k in range(8))
    np.testing.assert_allclose(np.asarray(recon),
                               np.asarray(ref_int).astype(np.float32), atol=1.0)

    # xyz on a non-128-divisible spatial size: exercises the rare pad fallback.
    x_odd = jax.random.randint(jax.random.PRNGKey(3), (1, 3, 10, 10),
                               0, 256, dtype=jnp.int32)
    out_xyz = jax.block_until_ready(bitplane_color_encode(x_odd, "xyz"))
    assert out_xyz.shape == (7, 1, 3, 10, 10) and out_xyz.dtype == jnp.float32

    # Exercise a 7-bit color path too.
    out_cmy = jax.block_until_ready(bitplane_color_encode(x, "cmy"))
    assert out_cmy.shape == (7, 2, 3, 16, 16) and out_cmy.dtype == jnp.float32

    print("KERNEL_OK")
</pallas_src>

<mosaic_0001>
module attributes {stable_mosaic.version = 11 : i64} {
  func.func @_rgb_bitplane_kernel(%arg0: i32, %arg1: memref<3x512xi32, #tpu.memory_space<vmem>>, %arg2: memref<8x3x512xf32, #tpu.memory_space<vmem>>) attributes {dimension_semantics = [#tpu.dimension_semantics<parallel>], iteration_bounds = array<i64: 1>, scalar_prefetch = 0 : i64, scratch_operands = 0 : i64, tpu.core_type = #tpu.core_type<tc>, window_params = [{transform_indices = @transform_0, window_bounds = array<i64: 3, 512>}, {transform_indices = @transform_1, window_bounds = array<i64: 8, 3, 512>}]} {
    %c0 = arith.constant 0 : index
    %c0_0 = arith.constant 0 : index
    %0 = vector.load %arg1[%c0, %c0_0] : memref<3x512xi32, #tpu.memory_space<vmem>>, vector<3x512xi32>
    %c1_i32 = arith.constant 1 : i32
    %1 = vector.broadcast %c1_i32 : i32 to vector<3x512xi32>
    %2 = arith.andi %0, %1 : vector<3x512xi32>
    %3 = arith.sitofp %2 : vector<3x512xi32> to vector<3x512xf32>
    %c0_1 = arith.constant 0 : index
    %c0_2 = arith.constant 0 : index
    %c0_3 = arith.constant 0 : index
    %4 = vector.load %arg2[%c0_1, %c0_2, %c0_3] : memref<8x3x512xf32, #tpu.memory_space<vmem>>, vector<1x3x512xf32>
    %5 = vector.shape_cast %4 : vector<1x3x512xf32> to vector<3x512xf32>
    %6 = vector.shape_cast %3 : vector<3x512xf32> to vector<1x3x512xf32>
    tpu.vector_store %arg2[%c0_1, %c0_2, %c0_3], %6 {strides = array<i32>} : memref<8x3x512xf32, #tpu.memory_space<vmem>>, vector<1x3x512xf32>,
    %c1_i32_4 = arith.constant 1 : i32
    %7 = vector.broadcast %c1_i32_4 : i32 to vector<3x512xi32>
    %8 = arith.shrsi %0, %7 : vector<3x512xi32>
    %c1_i32_5 = arith.constant 1 : i32
    %9 = vector.broadcast %c1_i32_5 : i32 to vector<3x512xi32>
    %10 = arith.andi %8, %9 : vector<3x512xi32>
    %11 = arith.sitofp %10 : vector<3x512xi32> to vector<3x512xf32>
    %c1 = arith.constant 1 : index
    %c0_6 = arith.constant 0 : index
    %c0_7 = arith.constant 0 : index
    %12 = vector.load %arg2[%c1, %c0_6, %c0_7] : memref<8x3x512xf32, #tpu.memory_space<vmem>>, vector<1x3x512xf32>
    %13 = vector.shape_cast %12 : vector<1x3x512xf32> to vector<3x512xf32>
    %14 = vector.shape_cast %11 : vector<3x512xf32> to vector<1x3x512xf32>
    tpu.vector_store %arg2[%c1, %c0_6, %c0_7], %14 {strides = array<i32>} : memref<8x3x512xf32, #tpu.memory_space<vmem>>, vector<1x3x512xf32>,
    %c1_i32_8 = arith.constant 1 : i32
    %15 = vector.broadcast %c1_i32_8 : i32 to vector<3x512xi32>
    %16 = arith.shrsi %8, %15 : vector<3x512xi32>
    %c1_i32_9 = arith.constant 1 : i32
    %17 = vector.broadcast %c1_i32_9 : i32 to vector<3x512xi32>
    %18 = arith.andi %16, %17 : vector<3x512xi32>
    %19 = arith.sitofp %18 : vector<3x512xi32> to vector<3x512xf32>
    %c2 = arith.constant 2 : index
    %c0_10 = arith.constant 0 : index
    %c0_11 = arith.constant 0 : index
    %20 = vector.load %arg2[%c2, %c0_10, %c0_11] : memref<8x3x512xf32, #tpu.memory_space<vmem>>, vector<1x3x512xf32>
    %21 = vector.shape_cast %20 : vector<1x3x512xf32> to vector<3x512xf32>
    %22 = vector.shape_cast %19 : vector<3x512xf32> to vector<1x3x512xf32>
    tpu.vector_store %arg2[%c2, %c0_10, %c0_11], %22 {strides = array<i32>} : memref<8x3x512xf32, #tpu.memory_space<vmem>>, vector<1x3x512xf32>,
    %c1_i32_12 = arith.constant 1 : i32
    %23 = vector.broadcast %c1_i32_12 : i32 to vector<3x512xi32>
    %24 = arith.shrsi %16, %23 : vector<3x512xi32>
    %c1_i32_13 = arith.constant 1 : i32
    %25 = vector.broadcast %c1_i32_13 : i32 to vector<3x512xi32>
    %26 = arith.andi %24, %25 : vector<3x512xi32>
    %27 = arith.sitofp %26 : vector<3x512xi32> to vector<3x512xf32>
    %c3 = arith.constant 3 : index
    %c0_14 = arith.constant 0 : index
    %c0_15 = arith.constant 0 : index
    %28 = vector.load %arg2[%c3, %c0_14, %c0_15] : memref<8x3x512xf32, #tpu.memory_space<vmem>>, vector<1x3x512xf32>
    %29 = vector.shape_cast %28 : vector<1x3x512xf32> to vector<3x512xf32>
    %30 = vector.shape_cast %27 : vector<3x512xf32> to vector<1x3x512xf32>
    tpu.vector_store %arg2[%c3, %c0_14, %c0_15], %30 {strides = array<i32>} : memref<8x3x512xf32, #tpu.memory_space<vmem>>, vector<1x3x512xf32>,
    %c1_i32_16 = arith.constant 1 : i32
    %31 = vector.broadcast %c1_i32_16 : i32 to vector<3x512xi32>
    %32 = arith.shrsi %24, %31 : vector<3x512xi32>
    %c1_i32_17 = arith.constant 1 : i32
    %33 = vector.broadcast %c1_i32_17 : i32 to vector<3x512xi32>
    %34 = arith.andi %32, %33 : vector<3x512xi32>
    %35 = arith.sitofp %34 : vector<3x512xi32> to vector<3x512xf32>
    %c4 = arith.constant 4 : index
    %c0_18 = arith.constant 0 : index
    %c0_19 = arith.constant 0 : index
    %36 = vector.load %arg2[%c4, %c0_18, %c0_19] : memref<8x3x512xf32, #tpu.memory_space<vmem>>, vector<1x3x512xf32>
    %37 = vector.shape_cast %36 : vector<1x3x512xf32> to vector<3x512xf32>
    %38 = vector.shape_cast %35 : vector<3x512xf32> to vector<1x3x512xf32>
    tpu.vector_store %arg2[%c4, %c0_18, %c0_19], %38 {strides = array<i32>} : memref<8x3x512xf32, #tpu.memory_space<vmem>>, vector<1x3x512xf32>,
    %c1_i32_20 = arith.constant 1 : i32
    %39 = vector.broadcast %c1_i32_20 : i32 to vector<3x512xi32>
    %40 = arith.shrsi %32, %39 : vector<3x512xi32>
    %c1_i32_21 = arith.constant 1 : i32
    %41 = vector.broadcast %c1_i32_21 : i32 to vector<3x512xi32>
    %42 = arith.andi %40, %41 : vector<3x512xi32>
    %43 = arith.sitofp %42 : vector<3x512xi32> to vector<3x512xf32>
    %c5 = arith.constant 5 : index
    %c0_22 = arith.constant 0 : index
    %c0_23 = arith.constant 0 : index
    %44 = vector.load %arg2[%c5, %c0_22, %c0_23] : memref<8x3x512xf32, #tpu.memory_space<vmem>>, vector<1x3x512xf32>
    %45 = vector.shape_cast %44 : vector<1x3x512xf32> to vector<3x512xf32>
    %46 = vector.shape_cast %43 : vector<3x512xf32> to vector<1x3x512xf32>
    tpu.vector_store %arg2[%c5, %c0_22, %c0_23], %46 {strides = array<i32>} : memref<8x3x512xf32, #tpu.memory_space<vmem>>, vector<1x3x512xf32>,
    %c1_i32_24 = arith.constant 1 : i32
    %47 = vector.broadcast %c1_i32_24 : i32 to vector<3x512xi32>
    %48 = arith.shrsi %40, %47 : vector<3x512xi32>
    %c1_i32_25 = arith.constant 1 : i32
    %49 = vector.broadcast %c1_i32_25 : i32 to vector<3x512xi32>
    %50 = arith.andi %48, %49 : vector<3x512xi32>
    %51 = arith.sitofp %50 : vector<3x512xi32> to vector<3x512xf32>
    %c6 = arith.constant 6 : index
    %c0_26 = arith.constant 0 : index
    %c0_27 = arith.constant 0 : index
    %52 = vector.load %arg2[%c6, %c0_26, %c0_27] : memref<8x3x512xf32, #tpu.memory_space<vmem>>, vector<1x3x512xf32>
    %53 = vector.shape_cast %52 : vector<1x3x512xf32> to vector<3x512xf32>
    %54 = vector.shape_cast %51 : vector<3x512xf32> to vector<1x3x512xf32>
    tpu.vector_store %arg2[%c6, %c0_26, %c0_27], %54 {strides = array<i32>} : memref<8x3x512xf32, #tpu.memory_space<vmem>>, vector<1x3x512xf32>,
    %c1_i32_28 = arith.constant 1 : i32
    %55 = vector.broadcast %c1_i32_28 : i32 to vector<3x512xi32>
    %56 = arith.shrsi %48, %55 : vector<3x512xi32>
    %c1_i32_29 = arith.constant 1 : i32
    %57 = vector.broadcast %c1_i32_29 : i32 to vector<3x512xi32>
    %58 = arith.andi %56, %57 : vector<3x512xi32>
    %59 = arith.sitofp %58 : vector<3x512xi32> to vector<3x512xf32>
    %c7 = arith.constant 7 : index
    %c0_30 = arith.constant 0 : index
    %c0_31 = arith.constant 0 : index
    %60 = vector.load %arg2[%c7, %c0_30, %c0_31] : memref<8x3x512xf32, #tpu.memory_space<vmem>>, vector<1x3x512xf32>
    %61 = vector.shape_cast %60 : vector<1x3x512xf32> to vector<3x512xf32>
    %62 = vector.shape_cast %59 : vector<3x512xf32> to vector<1x3x512xf32>
    tpu.vector_store %arg2[%c7, %c0_30, %c0_31], %62 {strides = array<i32>} : memref<8x3x512xf32, #tpu.memory_space<vmem>>, vector<1x3x512xf32>,
    return
  }
  func.func @transform_0(%arg0: i32) -> (i32, i32) {
    %c0_i32 = arith.constant 0 : i32
    %c0_i32_0 = arith.constant 0 : i32
    return %arg0, %c0_i32 : i32, i32
  }
  func.func @transform_1(%arg0: i32) -> (i32, i32, i32) {
    %c0_i32 = arith.constant 0 : i32
    %c0_i32_0 = arith.constant 0 : i32
    %c0_i32_1 = arith.constant 0 : i32
    return %c0_i32, %arg0, %c0_i32_0 : i32, i32, i32
  }
}

</mosaic_0001>

<llo_original>
// kernel: tpu_custom_call.1
$region0: #{tpu_custom_call.1}
  #allocation0 [shape = 'u32[]', space=smem, size = 0x4, offset = 0x4, fixed_abs, tag = 'smem constant byte address 0x4 - core index']
  #allocation1 [shape = 'u32[144,128]{1,0:T(1,128)}', space=vmem, size = 0x12000, scoped, tag = 'internal scratch']
  %s0 = inlined_call_operand.hbm [shape: s32[3,512], index: 0, kind: input, shape index: {}]
  %s1 = inlined_call_operand.vmem [shape: f32[8,3,512], index: 1, kind: output, shape index: {}]
  %s2 = sld [smem:[#allocation0]]
  $region18: #{tpu_custom_call.1} parent=0
    _
  %s4 = ssub.s32 1, %s2
  %s5 = scalar_select 0, %s4, %s2
  $region1: #{tpu_custom_call.1} parent=0
    #allocation2 [shape = 'u8[8192]{0}', space=vmem, size = 0x2000, scoped, tag = 'input window, operand 0, single buffered']
    #allocation3 [shape = 's32[1]{0}', space=sflag, size = 0x4, scoped, tag = 'scoped memory for tpu_custom_call.1']
    %6 = vsyncpa [#allocation3], 0
    // Predicated region
    $region2: #{tpu_custom_call.1} parent=1 // pred_check
      _
    $region3: #{tpu_custom_call.1} parent=1 // pred_check_branch
      %8 = sbr.rel (0) target = $region5
    $region4: #{tpu_custom_call.1} parent=1 // pred_region
      %s10 = ssub.s32 256, 256
      %11 = vsyncadd [#allocation3], %s10
      %s13 = sshll.u32 [#allocation2], 4
      %s14 = int_to_ptr.vmem [resolvable:$true] %s13
      %16 = dma.hbm_to_vmem [thread:$0]  %s0, 256, %s14, [#allocation3]
    $region5: #{tpu_custom_call.1} parent=1 // pred_fallthru
      _
    // Predicated region
    $region6: #{tpu_custom_call.1} parent=1 // pred_check
      _
    $region7: #{tpu_custom_call.1} parent=1 // pred_check_branch
      %18 = sbr.rel (0) target = $region9
    $region8: #{tpu_custom_call.1} parent=1 // pred_region
      %19 = dma.done [#allocation3], 256
    $region9: #{tpu_custom_call.1} parent=1 // pred_fallthru
      _
    %v20 = vld [vmem:[#allocation2] sm:$0x77]
    %v21 = vld [vmem:[#allocation2 + $0x8] sm:$0x77]
    %v22 = vand.u32 %v20, 1
    %v23 = vand.u32 %v21, 1
    %v24 = vcvt.s32.f32 %v22
    %v25 = vcvt.s32.f32 %v23
    %26 = vst [vmem:[%s1] sm:$0x77] %v24
    %27 = vst [vmem:[%s1 + $0x8] sm:$0x77] %v25
    %v28 = vshra.s32 %v20, 1
    %v29 = vshra.s32 %v21, 1
    %v30 = vand.u32 %v28, 1
    %v31 = vand.u32 %v29, 1
    %v32 = vcvt.s32.f32 %v30
    %v33 = vcvt.s32.f32 %v31
    %s34 = scalar_lea.vmem %s1, 16
    %35 = vst [vmem:[%s34] sm:$0x77] %v32
    %36 = vst [vmem:[%s34 + $0x8] sm:$0x77] %v33
    %v37 = vshra.s32 %v28, 1
    %v38 = vshra.s32 %v29, 1
    %v39 = vand.u32 %v37, 1
    %v40 = vand.u32 %v38, 1
    %v41 = vcvt.s32.f32 %v39
    %v42 = vcvt.s32.f32 %v40
    %s43 = scalar_lea.vmem %s1, 32
    %44 = vst [vmem:[%s43] sm:$0x77] %v41
    %45 = vst [vmem:[%s43 + $0x8] sm:$0x77] %v42
    %v46 = vshra.s32 %v37, 1
    %v47 = vshra.s32 %v38, 1
    %v48 = vand.u32 %v46, 1
    %v49 = vand.u32 %v47, 1
    %v50 = vcvt.s32.f32 %v48
    %v51 = vcvt.s32.f32 %v49
    %s52 = scalar_lea.vmem %s1, 48
    %53 = vst [vmem:[%s52] sm:$0x77] %v50
    %54 = vst [vmem:[%s52 + $0x8] sm:$0x77] %v51
    %v55 = vshra.s32 %v46, 1
    %v56 = vshra.s32 %v47, 1
    %v57 = vand.u32 %v55, 1
    %v58 = vand.u32 %v56, 1
    %v59 = vcvt.s32.f32 %v57
    %v60 = vcvt.s32.f32 %v58
    %s61 = scalar_lea.vmem %s1, 64
    %62 = vst [vmem:[%s61] sm:$0x77] %v59
    %63 = vst [vmem:[%s61 + $0x8] sm:$0x77] %v60
    %v64 = vshra.s32 %v55, 1
    %v65 = vshra.s32 %v56, 1
    %v66 = vand.u32 %v64, 1
    %v67 = vand.u32 %v65, 1
    %v68 = vcvt.s32.f32 %v66
    %v69 = vcvt.s32.f32 %v67
    %s70 = scalar_lea.vmem %s1, 80
    %71 = vst [vmem:[%s70] sm:$0x77] %v68
    %72 = vst [vmem:[%s70 + $0x8] sm:$0x77] %v69
    %v73 = vshra.s32 %v64, 1
    %v74 = vshra.s32 %v65, 1
    %v75 = vand.u32 %v73, 1
    %v76 = vand.u32 %v74, 1
    %v77 = vcvt.s32.f32 %v75
    %v78 = vcvt.s32.f32 %v76
    %s79 = scalar_lea.vmem %s1, 96
    %80 = vst [vmem:[%s79] sm:$0x77] %v77
    %81 = vst [vmem:[%s79 + $0x8] sm:$0x77] %v78
    %v82 = vshra.s32 %v73, 1
    %v83 = vshra.s32 %v74, 1
    %v84 = vand.u32 %v82, 1
    %v85 = vand.u32 %v83, 1
    %v86 = vcvt.s32.f32 %v84
    %v87 = vcvt.s32.f32 %v85
    %s88 = scalar_lea.vmem %s1, 112
    %89 = vst [vmem:[%s88] sm:$0x77] %v86
    %90 = vst [vmem:[%s88 + $0x8] sm:$0x77] %v87
    // Predicated region
    $region10: #{tpu_custom_call.1} parent=1 // pred_check
      _
    $region11: #{tpu_custom_call.1} parent=1 // pred_check_branch
      %92 = sbr.rel (0) target = $region13
    $region12: #{tpu_custom_call.1} parent=1 // pred_region
      _
    $region13: #{tpu_custom_call.1} parent=1 // pred_fallthru
      _
    // Predicated region
    $region14: #{tpu_custom_call.1} parent=1 // pred_check
      _
    $region15: #{tpu_custom_call.1} parent=1 // pred_check_branch
      %94 = sbr.rel (0) target = $region17
    $region16: #{tpu_custom_call.1} parent=1 // pred_region
      _
    $region17: #{tpu_custom_call.1} parent=1 // pred_fallthru
      _
    %95 = vsyncpa [#allocation3], 1

</llo_original>
